<compile_context>
chip_gen: v5e
topology: v5e:2x2
jax: 0.10.0
libtpu: 0.0.40
codegen_flags: <defaults>
</compile_context>

<pallas_src>
import functools
import math

import jax
import jax.numpy as jnp
from jax import lax
from jax.experimental import pallas as pl
from jax.experimental.pallas import tpu as pltpu


def moe_kernel(x_ref, noise_ref, wr_ref, we_ref, out_ref,
               combine_ref, acc_ref, *scratch, topk):
    """Grid = (token_tiles, out_col_tiles, experts); expert axis is the reduction axis."""
    j = pl.program_id(1)
    e = pl.program_id(2)
    xc_ref = scratch[0] if scratch else None   # x tile cast to expert-matmul dtype (optional)

    # ------------- gating: once per token tile (j == 0, e == 0), cached in VMEM -------------
    @pl.when((j == 0) & (e == 0))
    def _gating():
        # Routing math is kept in f32 regardless of the expert-matmul dtype (near-tie
        # expert selection must not flip when bf16/fp8 operands are used downstream).
        x_f32 = x_ref[...].astype(jnp.float32)
        logits = jnp.dot(x_f32, wr_ref[...].astype(jnp.float32),
                         preferred_element_type=jnp.float32)
        logits = logits + noise_ref[...].astype(jnp.float32)                 # (tt, E)

        tt, E = logits.shape
        if topk == 1:
            # torch path: softmax over experts BEFORE topk when topk_exp == 1
            lmax = jnp.max(logits, axis=-1, keepdims=True)
            el = jnp.exp(logits - lmax)
            logits = el / jnp.sum(el, axis=-1, keepdims=True)

        col = lax.broadcasted_iota(jnp.int32, (tt, E), 1)
        NEG = jnp.float32(-1e30)

        # iterative top-k (k is a small static constant), lowest-index tie-break
        work = logits
        top_vals, onehots = [], []
        for _ in range(topk):
            m = jnp.max(work, axis=-1, keepdims=True)                        # (tt, 1)
            sel = jnp.min(jnp.where(work == m, col, E), axis=-1, keepdims=True)
            oh = col == sel                                                  # (tt, E)
            top_vals.append(m)
            onehots.append(oh)
            work = jnp.where(oh, NEG, work)

        vals = jnp.concatenate(top_vals, axis=-1)                            # (tt, K)
        if topk > 1:
            vmax = jnp.max(vals, axis=-1, keepdims=True)
            ev = jnp.exp(vals - vmax)
            w = ev / jnp.sum(ev, axis=-1, keepdims=True)                     # softmax over k
        else:
            w = vals                                                         # already probs

        # combine[t, e] = routing weight of expert e for token t (0 if not selected)
        combine = jnp.zeros((tt, E), jnp.float32)
        for kk in range(topk):
            combine = combine + jnp.where(onehots[kk], w[:, kk:kk + 1], 0.0)
        combine_ref[...] = combine

        if xc_ref is not None:
            # one-time cast of the resident x tile to the expert-matmul dtype
            xc_ref[...] = x_ref[...].astype(xc_ref.dtype)

    @pl.when(e == 0)
    def _init_acc():
        acc_ref[...] = jnp.zeros_like(acc_ref)

    # ---------------- expert e, output-column tile j: one (D, tn) weight slab ----------------
    lhs = xc_ref[...] if xc_ref is not None else x_ref[...]                  # (tt, D)
    y = jnp.dot(lhs, we_ref[0], preferred_element_type=jnp.float32)          # (tt, tn) f32

    combine = combine_ref[...]                                               # (tt, E)
    col = lax.broadcasted_iota(jnp.int32, combine.shape, 1)
    gate_e = jnp.sum(jnp.where(col == e, combine, 0.0), axis=-1, keepdims=True)  # (tt, 1)

    acc_ref[...] += gate_e * y

    @pl.when(e == pl.num_programs(2) - 1)
    def _writeback():
        out_ref[...] = acc_ref[...].astype(out_ref.dtype)


def _nbytes(shape, dtype):
    return math.prod(shape) * jnp.dtype(dtype).itemsize


def moe_forward(x2d, noise, wr, we, *, topk, token_tile=512, n_tile=512,
                expert_dtype=None, vmem_limit_bytes=None):
    """Per-token routed MoE forward.

    Tuning notes (per generation, assuming bf16 expert operands):
      v6e:  token_tile 768-1024 (weights re-streamed per token tile; ~650 flop/byte
            needed to be MXU-bound), n_tile 256/512.
      v7x:  token_tile 384-512 but keep T // token_tile >= 2 so both TensorCores get
            token tiles; 64 MiB physical VMEM -> keep 2 * D * n_tile * bytes small.
      v5e:  token_tile 256-512, tiles in multiples of 128 (128x128 MXU); scoped VMEM
            default is only 16 MiB so vmem_limit_bytes (set below) matters most here.
    """
    T, D = x2d.shape
    E = wr.shape[-1]
    assert we.shape == (E, D, D)

    tt = min(token_tile, T)
    tn = min(n_tile, D)
    assert T % tt == 0, "token count must be divisible by the token tile"
    assert D % tn == 0, "n_embd must be divisible by the output-column tile"
    assert tt == T or tt % 8 == 0, "token tile must be sublane-aligned (multiple of 8)"
    assert tn == D or tn % 128 == 0, "output-column tile must be lane-aligned (multiple of 128)"

    compute_dtype = jnp.dtype(expert_dtype) if expert_dtype is not None else x2d.dtype
    cast_x = compute_dtype != x2d.dtype
    we_c = we if not cast_x and we.dtype == compute_dtype else we.astype(compute_dtype)

    kernel = functools.partial(moe_kernel, topk=topk)

    scratch_shapes = [
        pltpu.VMEM((tt, E), jnp.float32),          # cached combine (routing) weights
        pltpu.VMEM((tt, tn), jnp.float32),         # f32 accumulator (output-column tile)
    ]
    if cast_x:
        scratch_shapes.append(pltpu.VMEM((tt, D), compute_dtype))  # x tile in expert dtype

    if vmem_limit_bytes is None:
        working = 2 * (_nbytes((tt, D), x2d.dtype)          # x tile (double-buffered)
                       + _nbytes((tt, E), noise.dtype)      # noise tile
                       + _nbytes((D, E), wr.dtype)          # router weight
                       + _nbytes((1, D, tn), compute_dtype)  # expert-weight slab
                       + _nbytes((tt, tn), x2d.dtype))      # output tile
        working += _nbytes((tt, E), jnp.float32) + _nbytes((tt, tn), jnp.float32)
        if cast_x:
            working += _nbytes((tt, D), compute_dtype)
        # ~30% headroom + 1 MiB compiler-internal scratch; never below the 32 MiB default.
        # (On v7x the physical cap is 64 MiB -- choose tt/tn so `working` stays well under.)
        vmem_limit_bytes = min(max(int(working * 1.3) + (1 << 20), 32 << 20), 112 << 20)

    return pl.pallas_call(
        kernel,
        out_shape=jax.ShapeDtypeStruct((T, D), x2d.dtype),
        grid_spec=pltpu.PrefetchScalarGridSpec(
            num_scalar_prefetch=0,
            grid=(T // tt, D // tn, E),                          # experts innermost (reduction)
            in_specs=[
                pl.BlockSpec((tt, D), lambda i, j, e: (i, 0)),   # x tile (resident across j, e)
                pl.BlockSpec((tt, E), lambda i, j, e: (i, 0)),   # noise tile
                pl.BlockSpec((D, E), lambda i, j, e: (0, 0)),    # router weight (full, small)
                pl.BlockSpec((1, D, tn), lambda i, j, e: (e, 0, j)),  # one expert-weight slab
            ],
            out_specs=pl.BlockSpec((tt, tn), lambda i, j, e: (i, j)),
            scratch_shapes=scratch_shapes,
        ),
        compiler_params=pltpu.CompilerParams(
            # token axis "parallel" (megacore shards tokens); j stays "arbitrary" so the
            # (j == 0) gating guard is always seen by the core owning a token tile.
            dimension_semantics=("parallel", "arbitrary", "arbitrary"),
            vmem_limit_bytes=vmem_limit_bytes,
        ),
    )(x2d, noise, wr, we_c)


def moe_reference(x2d, noise, wr, we, topk, expert_dtype=None):
    """Plain-JAX reference with identical math (routing in f32, experts in expert_dtype)."""
    logits = (x2d.astype(jnp.float32) @ wr.astype(jnp.float32)
              + noise.astype(jnp.float32))
    if topk == 1:
        logits = jax.nn.softmax(logits, axis=-1)
    vals, idx = lax.top_k(logits, topk)
    w = jax.nn.softmax(vals, axis=-1) if topk > 1 else vals

    cd = jnp.dtype(expert_dtype) if expert_dtype is not None else x2d.dtype
    xe = x2d.astype(cd)
    wee = we.astype(cd)
    out = jnp.zeros(x2d.shape, jnp.float32)
    for e in range(we.shape[0]):
        y_e = jnp.dot(xe, wee[e], preferred_element_type=jnp.float32)
        w_e = jnp.sum(jnp.where(idx == e, w, 0.0), axis=-1, keepdims=True)
        out = out + w_e * y_e
    return out.astype(x2d.dtype)


if __name__ == "__main__":
    # config: batch=2, seq=8, n_embd=32, expert_num=4, topk_exp=2, noise_type=GUMBEL
    batch, seq, n_embd = 2, 8, 32
    expert_num, topk = 4, 2

    key = jax.random.PRNGKey(0)
    kx, kr, ke, kn = jax.random.split(key, 4)

    x = jax.random.normal(kx, (batch, seq, n_embd), dtype=jnp.float32)
    # per_token_router: Linear(n_embd, expert_num, bias=False), stored transposed (D, E)
    wr = jax.random.normal(kr, (n_embd, expert_num), dtype=jnp.float32) * 0.1
    # experts: Linear(n_embd, n_embd, bias=False) each, stored as (E, D, D)
    we = jax.random.normal(ke, (expert_num, n_embd, n_embd), dtype=jnp.float32) * 0.1

    # Gumbel-noise perturbation (gumbel_noise(n, k) = -log(-log(U)), U ~ Uniform(0,1))
    T = batch * seq
    u = jax.random.uniform(kn, (T, expert_num), minval=1e-6, maxval=1.0 - 1e-6)
    noise = -jnp.log(-jnp.log(u))

    x2d = x.reshape(-1, n_embd)

    # f32 expert path (operands in input dtype) -- tight check vs reference
    out2d = moe_forward(x2d, noise, wr, we, topk=topk)
    out = out2d.reshape(x.shape)
    jax.block_until_ready(out)
    ref = moe_reference(x2d, noise, wr, we, topk).reshape(x.shape)
    assert jnp.allclose(out, ref, atol=1e-4, rtol=1e-4), "mismatch vs f32 reference"

    # bf16 expert path (recommended for real shapes: halves weight HBM traffic) -- looser check
    out2d_bf = moe_forward(x2d, noise, wr, we, topk=topk, expert_dtype=jnp.bfloat16)
    jax.block_until_ready(out2d_bf)
    ref_bf = moe_reference(x2d, noise, wr, we, topk, expert_dtype=jnp.bfloat16)
    assert jnp.allclose(out2d_bf, ref_bf, atol=2e-2, rtol=2e-2), "mismatch vs bf16 reference"

    print("KERNEL_OK")
</pallas_src>

<mosaic_0001>
module attributes {stable_mosaic.version = 11 : i64} {
  func.func @moe_kernel(%arg0: i32, %arg1: i32, %arg2: i32, %arg3: memref<16x32xf32, #tpu.memory_space<vmem>>, %arg4: memref<16x4xf32, #tpu.memory_space<vmem>>, %arg5: memref<32x4xf32, #tpu.memory_space<vmem>>, %arg6: memref<1x32x32xf32, #tpu.memory_space<vmem>>, %arg7: memref<16x32xf32, #tpu.memory_space<vmem>>, %arg8: memref<16x4xf32, #tpu.memory_space<vmem>>, %arg9: memref<16x32xf32, #tpu.memory_space<vmem>>) attributes {dimension_semantics = [#tpu.dimension_semantics<parallel>, #tpu.dimension_semantics<arbitrary>, #tpu.dimension_semantics<arbitrary>], iteration_bounds = array<i64: 1, 1, 4>, scalar_prefetch = 0 : i64, scratch_operands = 2 : i64, tpu.core_type = #tpu.core_type<tc>, window_params = [{transform_indices = @transform_0, window_bounds = array<i64: 16, 32>}, {transform_indices = @transform_1, window_bounds = array<i64: 16, 4>}, {pipeline_mode = #tpu.pipeline_mode<synchronous>, transform_indices = @transform_2, window_bounds = array<i64: 32, 4>}, {transform_indices = @transform_3, window_bounds = array<i64: 1, 32, 32>}, {transform_indices = @transform_4, window_bounds = array<i64: 16, 32>}]} {
    %c0_i32 = arith.constant 0 : i32
    %0 = arith.cmpi eq, %arg1, %c0_i32 : i32
    %c0_i32_0 = arith.constant 0 : i32
    %1 = arith.cmpi eq, %arg2, %c0_i32_0 : i32
    %2 = arith.andi %0, %1 : i1
    %3 = arith.extui %2 : i1 to i32
    %c0_i32_1 = arith.constant 0 : i32
    %4 = arith.cmpi ne, %3, %c0_i32_1 : i32
    scf.if %4 {
      %c0_17 = arith.constant 0 : index
      %c0_18 = arith.constant 0 : index
      %28 = vector.load %arg3[%c0_17, %c0_18] : memref<16x32xf32, #tpu.memory_space<vmem>>, vector<16x32xf32>
      %c0_19 = arith.constant 0 : index
      %c0_20 = arith.constant 0 : index
      %29 = vector.load %arg5[%c0_19, %c0_20] : memref<32x4xf32, #tpu.memory_space<vmem>>, vector<32x4xf32>
      %cst_21 = arith.constant dense<0.000000e+00> : vector<16x4xf32>
      %30 = tpu.matmul %28, %29, %cst_21 {dimension_numbers = #tpu.dot_dimension_numbers<[1], [0], [0], [1], [0, 0, 1, 1], [], []>} : vector<16x32xf32>, vector<32x4xf32>, vector<16x4xf32> -> vector<16x4xf32>
      %c0_22 = arith.constant 0 : index
      %c0_23 = arith.constant 0 : index
      %31 = vector.load %arg4[%c0_22, %c0_23] : memref<16x4xf32, #tpu.memory_space<vmem>>, vector<16x4xf32>
      %32 = arith.addf %30, %31 : vector<16x4xf32>
      %33 = tpu.iota {dimensions = array<i32: 1>} : vector<16x4xi32>
      %cst_24 = arith.constant dense<0xFF800000> : vector<16xf32>
      %34 = vector.multi_reduction <maximumf>, %32, %cst_24 [1] : vector<16x4xf32> to vector<16xf32>
      %35 = vector.shape_cast %34 : vector<16xf32> to vector<16x1xf32>
      %36 = vector.broadcast %35 : vector<16x1xf32> to vector<16x4xf32>
      %37 = arith.cmpf oeq, %32, %36 : vector<16x4xf32>
      %c4_i32 = arith.constant 4 : i32
      %38 = vector.broadcast %c4_i32 : i32 to vector<16x4xi32>
      %39 = arith.select %37, %33, %38 : vector<16x4xi1>, vector<16x4xi32>
      %cst_25 = arith.constant dense<2147483647> : vector<16xi32>
      %40 = vector.multi_reduction <minsi>, %39, %cst_25 [1] : vector<16x4xi32> to vector<16xi32>
      %41 = vector.shape_cast %40 : vector<16xi32> to vector<16x1xi32>
      %42 = vector.broadcast %41 : vector<16x1xi32> to vector<16x4xi32>
      %43 = arith.cmpi eq, %33, %42 : vector<16x4xi32>
      %cst_26 = arith.constant -1.000000e+30 : f32
      %44 = vector.broadcast %cst_26 : f32 to vector<16x4xf32>
      %45 = arith.select %43, %44, %32 : vector<16x4xi1>, vector<16x4xf32>
      %cst_27 = arith.constant dense<0xFF800000> : vector<16xf32>
      %46 = vector.multi_reduction <maximumf>, %45, %cst_27 [1] : vector<16x4xf32> to vector<16xf32>
      %47 = vector.shape_cast %46 : vector<16xf32> to vector<16x1xf32>
      %48 = vector.broadcast %47 : vector<16x1xf32> to vector<16x4xf32>
      %49 = arith.cmpf oeq, %45, %48 : vector<16x4xf32>
      %c4_i32_28 = arith.constant 4 : i32
      %50 = vector.broadcast %c4_i32_28 : i32 to vector<16x4xi32>
      %51 = arith.select %49, %33, %50 : vector<16x4xi1>, vector<16x4xi32>
      %cst_29 = arith.constant dense<2147483647> : vector<16xi32>
      %52 = vector.multi_reduction <minsi>, %51, %cst_29 [1] : vector<16x4xi32> to vector<16xi32>
      %53 = vector.shape_cast %52 : vector<16xi32> to vector<16x1xi32>
      %54 = vector.broadcast %53 : vector<16x1xi32> to vector<16x4xi32>
      %55 = arith.cmpi eq, %33, %54 : vector<16x4xi32>
      %56 = tpu.concatenate %35, %47 in 1 : vector<16x1xf32>, vector<16x1xf32> -> vector<16x2xf32>
      %cst_30 = arith.constant dense<0xFF800000> : vector<16xf32>
      %57 = vector.multi_reduction <maximumf>, %56, %cst_30 [1] : vector<16x2xf32> to vector<16xf32>
      %58 = vector.shape_cast %57 : vector<16xf32> to vector<16x1xf32>
      %59 = vector.broadcast %58 : vector<16x1xf32> to vector<16x2xf32>
      %60 = arith.subf %56, %59 : vector<16x2xf32>
      %61 = math.exp %60 : vector<16x2xf32>
      %cst_31 = arith.constant dense<0.000000e+00> : vector<16xf32>
      %62 = vector.multi_reduction <add>, %61, %cst_31 [1] : vector<16x2xf32> to vector<16xf32>
      %63 = vector.shape_cast %62 : vector<16xf32> to vector<16x1xf32>
      %64 = vector.broadcast %63 : vector<16x1xf32> to vector<16x2xf32>
      %65 = arith.divf %61, %64 : vector<16x2xf32>
      %cst_32 = arith.constant 0.000000e+00 : f32
      %66 = vector.broadcast %cst_32 : f32 to vector<16x4xf32>
      %67 = vector.extract_strided_slice %65 {offsets = [0, 0], sizes = [16, 1], strides = [1, 1]} : vector<16x2xf32> to vector<16x1xf32>
      %cst_33 = arith.constant 0.000000e+00 : f32
      %68 = vector.shape_cast %67 : vector<16x1xf32> to vector<16x1xf32>
      %69 = vector.broadcast %68 : vector<16x1xf32> to vector<16x4xf32>
      %70 = vector.broadcast %cst_33 : f32 to vector<16x4xf32>
      %71 = arith.select %43, %69, %70 : vector<16x4xi1>, vector<16x4xf32>
      %72 = arith.addf %66, %71 : vector<16x4xf32>
      %73 = vector.extract_strided_slice %65 {offsets = [0, 1], sizes = [16, 1], strides = [1, 1]} : vector<16x2xf32> to vector<16x1xf32>
      %cst_34 = arith.constant 0.000000e+00 : f32
      %74 = vector.shape_cast %73 : vector<16x1xf32> to vector<16x1xf32>
      %75 = vector.broadcast %74 : vector<16x1xf32> to vector<16x4xf32>
      %76 = vector.broadcast %cst_34 : f32 to vector<16x4xf32>
      %77 = arith.select %55, %75, %76 : vector<16x4xi1>, vector<16x4xf32>
      %78 = arith.addf %72, %77 : vector<16x4xf32>
      %c0_35 = arith.constant 0 : index
      %c0_36 = arith.constant 0 : index
      %79 = vector.load %arg8[%c0_35, %c0_36] : memref<16x4xf32, #tpu.memory_space<vmem>>, vector<16x4xf32>
      tpu.vector_store %arg8[%c0_35, %c0_36], %78 {strides = array<i32>} : memref<16x4xf32, #tpu.memory_space<vmem>>, vector<16x4xf32>,
    } else {
    }
    %c0_i32_2 = arith.constant 0 : i32
    %5 = arith.cmpi eq, %arg2, %c0_i32_2 : i32
    %6 = arith.extui %5 : i1 to i32
    %c0_i32_3 = arith.constant 0 : i32
    %7 = arith.cmpi ne, %6, %c0_i32_3 : i32
    scf.if %7 {
      %cst_17 = arith.constant 0.000000e+00 : f32
      %28 = vector.broadcast %cst_17 : f32 to vector<16x32xf32>
      %c0_18 = arith.constant 0 : index
      %c0_19 = arith.constant 0 : index
      %29 = vector.load %arg9[%c0_18, %c0_19] : memref<16x32xf32, #tpu.memory_space<vmem>>, vector<16x32xf32>
      tpu.vector_store %arg9[%c0_18, %c0_19], %28 {strides = array<i32>} : memref<16x32xf32, #tpu.memory_space<vmem>>, vector<16x32xf32>,
    } else {
    }
    %c0 = arith.constant 0 : index
    %c0_4 = arith.constant 0 : index
    %8 = vector.load %arg3[%c0, %c0_4] : memref<16x32xf32, #tpu.memory_space<vmem>>, vector<16x32xf32>
    %c0_5 = arith.constant 0 : index
    %c0_6 = arith.constant 0 : index
    %c0_7 = arith.constant 0 : index
    %9 = vector.load %arg6[%c0_5, %c0_6, %c0_7] : memref<1x32x32xf32, #tpu.memory_space<vmem>>, vector<1x32x32xf32>
    %10 = vector.shape_cast %9 : vector<1x32x32xf32> to vector<32x32xf32>
    %cst = arith.constant dense<0.000000e+00> : vector<16x32xf32>
    %11 = tpu.matmul %8, %10, %cst {dimension_numbers = #tpu.dot_dimension_numbers<[1], [0], [0], [1], [0, 0, 1, 1], [], []>} : vector<16x32xf32>, vector<32x32xf32>, vector<16x32xf32> -> vector<16x32xf32>
    %c0_8 = arith.constant 0 : index
    %c0_9 = arith.constant 0 : index
    %12 = vector.load %arg8[%c0_8, %c0_9] : memref<16x4xf32, #tpu.memory_space<vmem>>, vector<16x4xf32>
    %13 = tpu.iota {dimensions = array<i32: 1>} : vector<16x4xi32>
    %14 = vector.broadcast %arg2 : i32 to vector<16x4xi32>
    %15 = arith.cmpi eq, %13, %14 : vector<16x4xi32>
    %cst_10 = arith.constant 0.000000e+00 : f32
    %16 = vector.broadcast %cst_10 : f32 to vector<16x4xf32>
    %17 = arith.select %15, %12, %16 : vector<16x4xi1>, vector<16x4xf32>
    %cst_11 = arith.constant dense<0.000000e+00> : vector<16xf32>
    %18 = vector.multi_reduction <add>, %17, %cst_11 [1] : vector<16x4xf32> to vector<16xf32>
    %19 = vector.shape_cast %18 : vector<16xf32> to vector<16x1xf32>
    %c0_12 = arith.constant 0 : index
    %c0_13 = arith.constant 0 : index
    %20 = vector.load %arg9[%c0_12, %c0_13] : memref<16x32xf32, #tpu.memory_space<vmem>>, vector<16x32xf32>
    %21 = vector.broadcast %19 : vector<16x1xf32> to vector<16x32xf32>
    %22 = arith.mulf %21, %11 : vector<16x32xf32>
    %23 = arith.addf %20, %22 : vector<16x32xf32>
    %c0_14 = arith.constant 0 : index
    %c0_15 = arith.constant 0 : index
    %24 = vector.load %arg9[%c0_14, %c0_15] : memref<16x32xf32, #tpu.memory_space<vmem>>, vector<16x32xf32>
    tpu.vector_store %arg9[%c0_14, %c0_15], %23 {strides = array<i32>} : memref<16x32xf32, #tpu.memory_space<vmem>>, vector<16x32xf32>,
    %c3_i32 = arith.constant 3 : i32
    %25 = arith.cmpi eq, %arg2, %c3_i32 : i32
    %26 = arith.extui %25 : i1 to i32
    %c0_i32_16 = arith.constant 0 : i32
    %27 = arith.cmpi ne, %26, %c0_i32_16 : i32
    scf.if %27 {
      %c0_17 = arith.constant 0 : index
      %c0_18 = arith.constant 0 : index
      %28 = vector.load %arg9[%c0_17, %c0_18] : memref<16x32xf32, #tpu.memory_space<vmem>>, vector<16x32xf32>
      %c0_19 = arith.constant 0 : index
      %c0_20 = arith.constant 0 : index
      %29 = vector.load %arg7[%c0_19, %c0_20] : memref<16x32xf32, #tpu.memory_space<vmem>>, vector<16x32xf32>
      tpu.vector_store %arg7[%c0_19, %c0_20], %28 {strides = array<i32>} : memref<16x32xf32, #tpu.memory_space<vmem>>, vector<16x32xf32>,
    } else {
    }
    return
  }
  func.func @transform_0(%arg0: i32, %arg1: i32, %arg2: i32) -> (i32, i32) {
    %c0_i32 = arith.constant 0 : i32
    %c0_i32_0 = arith.constant 0 : i32
    return %arg0, %c0_i32 : i32, i32
  }
  func.func @transform_1(%arg0: i32, %arg1: i32, %arg2: i32) -> (i32, i32) {
    %c0_i32 = arith.constant 0 : i32
    %c0_i32_0 = arith.constant 0 : i32
    return %arg0, %c0_i32 : i32, i32
  }
  func.func @transform_2(%arg0: i32, %arg1: i32, %arg2: i32) -> (i32, i32) {
    %c0_i32 = arith.constant 0 : i32
    %c0_i32_0 = arith.constant 0 : i32
    %c0_i32_1 = arith.constant 0 : i32
    return %c0_i32, %c0_i32_0 : i32, i32
  }
  func.func @transform_3(%arg0: i32, %arg1: i32, %arg2: i32) -> (i32, i32, i32) {
    %c0_i32 = arith.constant 0 : i32
    %c0_i32_0 = arith.constant 0 : i32
    return %arg2, %c0_i32, %arg1 : i32, i32, i32
  }
  func.func @transform_4(%arg0: i32, %arg1: i32, %arg2: i32) -> (i32, i32) {
    %c0_i32 = arith.constant 0 : i32
    return %arg0, %arg1 : i32, i32
  }
}

</mosaic_0001>

<llo_original>
// kernel: tpu_custom_call.1
$region0: #{tpu_custom_call.1}
  #allocation0 [shape = 'u32[]', space=smem, size = 0x4, offset = 0x4, fixed_abs, tag = 'smem constant byte address 0x4 - core index']
  #allocation1 [shape = 'u32[72,128]{1,0:T(1,128)}', space=vmem, size = 0x9000, scoped, tag = 'internal scratch']
  #allocation2 [shape = 'f32[16,4]{1,0:T(8,128)}', space=vmem, size = 0x2000, scoped, tag = 'scratch operand']
  #allocation3 [shape = 'f32[16,32]{1,0:T(8,128)}', space=vmem, size = 0x2000, scoped, tag = 'scratch operand']
  %s0 = inlined_call_operand.vmem [shape: f32[16,32], index: 0, kind: input, shape index: {}]
  %s1 = inlined_call_operand.vmem [shape: f32[16,4], index: 1, kind: input, shape index: {}]
  %s2 = inlined_call_operand.vmem [shape: f32[32,4], index: 2, kind: input, shape index: {}]
  %s3 = inlined_call_operand.hbm [shape: f32[4,32,32], index: 3, kind: input, shape index: {}]
  %s4 = inlined_call_operand.hbm [shape: f32[16,32], index: 4, kind: output, shape index: {}]
  %s5 = sld [smem:[#allocation0]]
  $region65: #{tpu_custom_call.1} parent=0
    _
  %s7 = ssub.s32 1, %s5
  %s8 = scalar_select 0, %s7, %s5
  $region1: #{tpu_custom_call.1} parent=0
    #allocation4 [shape = 'u8[32768]{0}', space=vmem, size = 0x8000, scoped, tag = 'input window, operand 3']
    #allocation5 [shape = 's32[2]{0}', space=sflag, size = 0x8, scoped, tag = 'scoped memory for tpu_custom_call.1']
    #allocation6 [shape = 's32[2]{0}', space=sflag, size = 0x8, scoped, tag = 'scoped memory for tpu_custom_call.1']
    #allocation7 [shape = 'u8[8192]{0}', space=vmem, size = 0x2000, scoped, tag = 'output window, operand 0, single buffered']
    %9 = vsyncpa [#allocation5], 0
    %s10 = scalar_lea.sflag [#allocation5], 1
    %11 = vsyncpa %s10, 0
    %12 = vsyncpa [#allocation6], 0
    loop: start=0, step=1, limit=6
    $region2: #{tpu_custom_call.1} parent=1 // loop_pre_header
      _
    $region3: #{tpu_custom_call.1} parent=1 // loop_header
      %s14 = sphi 0, %s18
      %p15 = scmp.ge.s32.totalorder %s14, 6
      %s21 = sphi 0, %s40
      %s22 = sphi 0, %s36
      %s23 = sphi 0, %s32
      %s24 = sphi 0, %s21
      %s25 = sphi 0, %s22
      %s26 = sphi 0, %s23
      %s27 = sphi 0, %s24
      %s28 = sphi 0, %s25
      %s29 = sphi 0, %s26
      %s43 = sphi 0, %s45
      %s46 = sphi 0, %s43
      %s47 = sphi 0, %s46
      %s63 = sphi 0, %s47
      %s69 = sphi 0, %s71
      %s72 = sphi 0, %s69
      %s73 = sphi 0, %s72
      %s89 = sphi 0, %s73
      %s93 = sphi 0, %s93
      %s95 = sphi 0, %s93
      %s96 = sphi 0, %s95
      %s110 = sphi 0, %s96
      %s118 = sphi 0, %s120
      %s121 = sphi 0, %s118
      %s122 = sphi 0, %s121
      %s138 = sphi 0, %s122
      %s146 = sphi 0, %s148
      %s149 = sphi 0, %s146
      %s150 = sphi 0, %s149
      %s166 = sphi 0, %s150
    $region4: #{tpu_custom_call.1} parent=1 // loop_header_branch
      %17 = sbr.rel (%p15) target = $region8
    $region5: #{tpu_custom_call.1} parent=1 // loop_body
      %s19 = ssub.s32 %s14, 1
      %s20 = ssub.s32 %s14, 2
      %s30 = sadd.s32 1, %s23
      %p31 = scmp.ge.s32.totalorder %s30, 4
      %s32 = scalar_select %p31, 0, %s30
      %s33 = sadd.s32 1, %s22
      %s34 = scalar_select %p31, %s33, %s22
      %p35 = scmp.ge.s32.totalorder %s34, 1
      %s36 = scalar_select %p35, 0, %s34
      %s37 = sadd.s32 1, %s21
      %s38 = scalar_select %p35, %s37, %s21
      %p39 = scmp.ge.s32.totalorder %s38, 1
      %s40 = scalar_select %p39, 0, %s38
      %s41 = ssub.s32 %s21, %s40
      %p42 = scmp.eq.s32.totalorder %s41, 0
      %s44 = sadd.s32 %s43, 1
      %s45 = scalar_select %p42, %s43, %s44
      %p48 = pneg %p42
      %p49 = scmp.eq.s32.totalorder %s14, 3
      %p50 = por %p48, %p49
      %p51 = scmp.ne.s32.totalorder %s43, %s46
      %p52 = scmp.eq.s32.totalorder %s14, 0
      %p53 = por %p51, %p52
      %p54 = scmp.ne.s32.totalorder %s43, %s46
      %p55 = scmp.eq.s32.totalorder %s19, 3
      %p56 = por %p54, %p55
      %p57 = scmp.ne.s32.totalorder %s46, %s47
      %p58 = scmp.eq.s32.totalorder %s19, 0
      %p59 = por %p57, %p58
      %p60 = scmp.ne.s32.totalorder %s46, %s47
      %p61 = scmp.eq.s32.totalorder %s20, 3
      %p62 = por %p60, %p61
      %p64 = scmp.ne.s32.totalorder %s47, %s63
      %p65 = scmp.eq.s32.totalorder %s20, 0
      %p66 = por %p64, %p65
      %s67 = ssub.s32 %s21, %s40
      %p68 = scmp.eq.s32.totalorder %s67, 0
      %s70 = sadd.s32 %s69, 1
      %s71 = scalar_select %p68, %s69, %s70
      %p74 = pneg %p68
      %p75 = scmp.eq.s32.totalorder %s14, 3
      %p76 = por %p74, %p75
      %p77 = scmp.ne.s32.totalorder %s69, %s72
      %p78 = scmp.eq.s32.totalorder %s14, 0
      %p79 = por %p77, %p78
      %p80 = scmp.ne.s32.totalorder %s69, %s72
      %p81 = scmp.eq.s32.totalorder %s19, 3
      %p82 = por %p80, %p81
      %p83 = scmp.ne.s32.totalorder %s72, %s73
      %p84 = scmp.eq.s32.totalorder %s19, 0
      %p85 = por %p83, %p84
      %p86 = scmp.ne.s32.totalorder %s72, %s73
      %p87 = scmp.eq.s32.totalorder %s20, 3
      %p88 = por %p86, %p87
      %p90 = scmp.ne.s32.totalorder %s73, %s89
      %p91 = scmp.eq.s32.totalorder %s20, 0
      %p92 = por %p90, %p91
      %s94 = sadd.s32 %s93, 1
      %p97 = scmp.eq.s32.totalorder %s14, 3
      %p98 = scmp.ne.s32.totalorder %s93, %s95
      %p99 = scmp.eq.s32.totalorder %s14, 0
      %p100 = por %p98, %p99
      %p101 = scmp.ne.s32.totalorder %s93, %s95
      %p102 = scmp.eq.s32.totalorder %s19, 3
      %p103 = por %p101, %p102
      %p104 = scmp.ne.s32.totalorder %s95, %s96
      %p105 = scmp.eq.s32.totalorder %s19, 0
      %p106 = por %p104, %p105
      %p107 = scmp.ne.s32.totalorder %s95, %s96
      %p108 = scmp.eq.s32.totalorder %s20, 3
      %p109 = por %p107, %p108
      %p111 = scmp.ne.s32.totalorder %s96, %s110
      %p112 = scmp.eq.s32.totalorder %s20, 0
      %p113 = por %p111, %p112
      %s114 = ssub.s32 %s23, %s32
      %s115 = ssub.s32 %s22, %s36
      %s116 = sor.u32 %s114, %s115
      %p117 = scmp.eq.s32.totalorder %s116, 0
      %s119 = sadd.s32 %s118, 1
      %s120 = scalar_select %p117, %s118, %s119
      %p123 = pneg %p117
      %p124 = scmp.eq.s32.totalorder %s14, 3
      %p125 = por %p123, %p124
      %p126 = scmp.ne.s32.totalorder %s118, %s121
      %p127 = scmp.eq.s32.totalorder %s14, 0
      %p128 = por %p126, %p127
      %p129 = scmp.ne.s32.totalorder %s118, %s121
      %p130 = scmp.eq.s32.totalorder %s19, 3
      %p131 = por %p129, %p130
      %p132 = scmp.ne.s32.totalorder %s121, %s122
      %p133 = scmp.eq.s32.totalorder %s19, 0
      %p134 = por %p132, %p133
      %p135 = scmp.ne.s32.totalorder %s121, %s122
      %p136 = scmp.eq.s32.totalorder %s20, 3
      %p137 = por %p135, %p136
      %p139 = scmp.ne.s32.totalorder %s122, %s138
      %p140 = scmp.eq.s32.totalorder %s20, 0
      %p141 = por %p139, %p140
      %s142 = ssub.s32 %s21, %s40
      %s143 = ssub.s32 %s22, %s36
      %s144 = sor.u32 %s142, %s143
      %p145 = scmp.eq.s32.totalorder %s144, 0
      %s147 = sadd.s32 %s146, 1
      %s148 = scalar_select %p145, %s146, %s147
      %p151 = pneg %p145
      %p152 = scmp.eq.s32.totalorder %s14, 3
      %p153 = por %p151, %p152
      %p154 = scmp.ne.s32.totalorder %s146, %s149
      %p155 = scmp.eq.s32.totalorder %s14, 0
      %p156 = por %p154, %p155
      %p157 = scmp.ne.s32.totalorder %s146, %s149
      %p158 = scmp.eq.s32.totalorder %s19, 3
      %p159 = por %p157, %p158
      %p160 = scmp.ne.s32.totalorder %s149, %s150
      %p161 = scmp.eq.s32.totalorder %s19, 0
      %p162 = por %p160, %p161
      %p163 = scmp.ne.s32.totalorder %s149, %s150
      %p164 = scmp.eq.s32.totalorder %s20, 3
      %p165 = por %p163, %p164
      %p167 = scmp.ne.s32.totalorder %s150, %s166
      %p168 = scmp.eq.s32.totalorder %s20, 0
      %p169 = por %p167, %p168
      %p170 = scmp.le.s32.totalorder 1, %s14
      %p171 = scmp.lt.s32.totalorder %s14, 5
      %p172 = pnand %p170, %p171
      %p173 = pneg %p172
      // Predicated region
      $region9: #{tpu_custom_call.1} parent=5 // pred_check
        _
      $region10: #{tpu_custom_call.1} parent=5 // pred_check_branch
        %175 = sbr.rel (%p172) target = $region12
      $region11: #{tpu_custom_call.1} parent=5 // pred_region
        %s176 = ssub.s32 %s14, 1
        // Predicated region
        $region13: #{tpu_custom_call.1} parent=11 // pred_check
          %p177 = pneg %p59
        $region14: #{tpu_custom_call.1} parent=11 // pred_check_branch
          %179 = sbr.rel (%p177) target = $region16
        $region15: #{tpu_custom_call.1} parent=11 // pred_region
          %s180 = smul.u32 2, %s24
          %p181 = scmp.lt.s32.totalorder %s180, 1
          %s182 = scalar_select %p181, %s180, 1
          %s183 = smul.addr %s182, 8
          %s184 = scalar_lea.vmem %s0, %s183
          %s185 = smul.u32 2, %s24
        $region16: #{tpu_custom_call.1} parent=11 // pred_fallthru
          _
        // Predicated region
        $region17: #{tpu_custom_call.1} parent=11 // pred_check
          %p186 = pneg %p85
        $region18: #{tpu_custom_call.1} parent=11 // pred_check_branch
          %188 = sbr.rel (%p186) target = $region20
        $region19: #{tpu_custom_call.1} parent=11 // pred_region
          %s189 = smul.u32 2, %s24
          %p190 = scmp.lt.s32.totalorder %s189, 1
          %s191 = scalar_select %p190, %s189, 1
          %s192 = smul.addr %s191, 8
          %s193 = scalar_lea.vmem %s1, %s192
          %s194 = smul.u32 2, %s24
        $region20: #{tpu_custom_call.1} parent=11 // pred_fallthru
          _
        // Predicated region
        $region21: #{tpu_custom_call.1} parent=11 // pred_check
          %p195 = pneg %p106
        $region22: #{tpu_custom_call.1} parent=11 // pred_check_branch
          %197 = sbr.rel (%p195) target = $region24
        $region23: #{tpu_custom_call.1} parent=11 // pred_region
          _
        $region24: #{tpu_custom_call.1} parent=11 // pred_fallthru
          _
      $region12: #{tpu_custom_call.1} parent=5 // pred_fallthru
        _
      %p198 = scmp.lt.s32.totalorder %s14, 4
      // Predicated region
      $region25: #{tpu_custom_call.1} parent=5 // pred_check
        %p199 = pneg %p198
      $region26: #{tpu_custom_call.1} parent=5 // pred_check_branch
        %201 = sbr.rel (%p199) target = $region28
      $region27: #{tpu_custom_call.1} parent=5 // pred_region
        // Predicated region
        $region29: #{tpu_custom_call.1} parent=27 // pred_check
          %p202 = pneg %p128
        $region30: #{tpu_custom_call.1} parent=27 // pred_check_branch
          %204 = sbr.rel (%p202) target = $region32
        $region31: #{tpu_custom_call.1} parent=27 // pred_region
          %s205 = sand.u32 %s118, 1
          %s206 = scalar_lea.sflag [#allocation5], %s205
          %s207 = sand.u32 %s118, 1
          %s208 = smul.addr %s207, 32
          %s209 = scalar_lea.vmem [#allocation4], %s208
          %211 = vsyncadd %s206, 0
          %s212 = smul.addr %s23, 4
          %s213 = sadd.s32 %s22, %s212
          %s214 = smul.addr %s213, 8
          %s215 = scalar_lea.hbm %s3, %s214
          %s216 = sshll.u32 %s215, 4
          %s217 = int_to_ptr.hbm [resolvable:$true] %s216
          %s218 = sshll.u32 %s209, 4
          %s219 = int_to_ptr.vmem [resolvable:$true] %s218
          %224 = dma.hbm_to_vmem [thread:$0]  %s217, 512, %s219, %s206, 128, 128, 8
        $region32: #{tpu_custom_call.1} parent=27 // pred_fallthru
          _
      $region28: #{tpu_custom_call.1} parent=5 // pred_fallthru
        _
      %p225 = scmp.le.s32.totalorder 1, %s14
      %p226 = scmp.lt.s32.totalorder %s14, 5
      %p227 = pnand %p225, %p226
      %p228 = pneg %p227
      // Predicated region
      $region33: #{tpu_custom_call.1} parent=5 // pred_check
        _
      $region34: #{tpu_custom_call.1} parent=5 // pred_check_branch
        %230 = sbr.rel (%p227) target = $region36
      $region35: #{tpu_custom_call.1} parent=5 // pred_region
        %s231 = ssub.s32 %s14, 1
        %s232 = sand.u32 %s121, 1
        %s233 = scalar_lea.sflag [#allocation5], %s232
        %s234 = sand.u32 %s121, 1
        %s235 = smul.addr %s234, 32
        %s236 = scalar_lea.vmem [#allocation4], %s235
        // Predicated region
        $region37: #{tpu_custom_call.1} parent=35 // pred_check
          %p237 = pneg %p134
        $region38: #{tpu_custom_call.1} parent=35 // pred_check_branch
          %239 = sbr.rel (%p237) target = $region40
        $region39: #{tpu_custom_call.1} parent=35 // pred_region
          %241 = dma.done %s233, 512
        $region40: #{tpu_custom_call.1} parent=35 // pred_fallthru
          _
        %s242 = smul.u32 2, %s24
        %p243 = scmp.lt.s32.totalorder %s242, 1
        %s244 = scalar_select %p243, %s242, 1
        %s245 = smul.addr %s244, 8
        %s246 = scalar_lea.vmem %s0, %s245
        %p247 = pneg %p59
        %p248 = pneg %p56
        %s249 = smul.u32 2, %s24
        %p250 = scmp.lt.s32.totalorder %s249, 1
        %s251 = scalar_select %p250, %s249, 1
        %s252 = smul.addr %s251, 8
        %s253 = scalar_lea.vmem %s1, %s252
        %p254 = pneg %p85
        %p255 = pneg %p82
        %p256 = pneg %p106
        %p257 = pneg %p103
        %s258 = sand.u32 %s121, 1
        %s259 = scalar_lea.sflag [#allocation5], %s258
        %s260 = sand.u32 %s121, 1
        %s261 = smul.addr %s260, 32
        %s262 = scalar_lea.vmem [#allocation4], %s261
        %p263 = pneg %p134
        %p264 = pneg %p131
        %p265 = pneg %p162
        %p266 = pneg %p159
        %s267 = smul.u32 2, %s24
        %p268 = scmp.lt.s32.totalorder %s267, 1
        %s269 = scalar_select %p268, %s267, 1
        %s270 = smul.addr %s269, 8
        %s271 = scalar_lea.vmem %s0, %s270
        %s272 = smul.u32 2, %s24
        %s273 = smul.u32 2, %s24
        %p274 = scmp.lt.s32.totalorder %s273, 1
        %s275 = scalar_select %p274, %s273, 1
        %s276 = smul.addr %s275, 8
        %s277 = scalar_lea.vmem %s1, %s276
        %s278 = smul.u32 2, %s24
        %s279 = smul.u32 2, %s24
        %p280 = scmp.eq.s32.totalorder %s25, 0
        %p281 = scmp.eq.s32.totalorder %s26, 0
        %p282 = pnand %p280, %p281
        %p283 = pneg %p282
        // Predicated region
        $region41: #{tpu_custom_call.1} parent=35 // pred_check
          _
        $region42: #{tpu_custom_call.1} parent=35 // pred_check_branch
          %285 = sbr.rel (%p282) target = $region44
        $region43: #{tpu_custom_call.1} parent=35 // pred_region
          %v286 = vld [vmem:[%s271] sm:$0xff]
          %v287 = vld [vmem:[%s271 + $0x8] sm:$0xff]
          %v288 = vld [vmem:[%s2] sm:$0xff]
          %v289 = vld [vmem:[%s2 + $0x8] sm:$0xff]
          %v290 = vld [vmem:[%s2 + $0x10] sm:$0xff]
          %v291 = vld [vmem:[%s2 + $0x18] sm:$0xff]
          %v292 = vld [vmem:[%s277] sm:$0xff]
          %v293 = vld [vmem:[%s277 + $0x8] sm:$0xff]
          %vm294 = vcmask 261120
          %v296 = vsel %vm294, %v286, 0
          %v299 = vsel %vm294, %v287, 0
          %301 = vmatpush.msra.mxu0 0.0
          %302 = vmatpush.msra.mxu0 0.0
          %303 = vmatpush.msra.mxu0 0.0
          %304 = vmatpush.msra.mxu0 0.0
          %305 = vmatpush.msra.mxu0 0.0
          %306 = vmatpush.msra.mxu0 0.0
          %307 = vmatpush.msra.mxu0 0.0
          %308 = vmatpush.msra.mxu0 0.0
          %309 = vmatpush.msra.mxu0 0.0
          %310 = vmatpush.msra.mxu0 0.0
          %311 = vmatpush.msra.mxu0 0.0
          %312 = vmatpush.msra.mxu0 0.0
          %313 = vmatpush.msra.mxu0 %v291
          %314 = vmatpush.msra.mxu0 %v290
          %315 = vmatpush.msra.mxu0 %v289
          %316 = vmatpush.msra.mxu0 %v288
          %317 = vmatmul.f32.gmra.mxu0 %v296
          %v318 = vpop.f32.mrf.mxu0
          %v319 = vadd.f32 %v292, %v318
          %320 = vmatmul.f32.gmra.mxu0 %v299
          %v321 = vpop.f32.mrf.mxu0
          %v322 = vadd.f32 %v293, %v321
          %323 = vdwg.mxu0
          %v324 = vlaneseq
          %v325 = vand.u32 %v324, 127
          %vm326 = vcmask 31744
          %v327 = vsel %vm326, %v319, -inf
          %328 = vmax.xlane.f32.xlu0 %v327
          %v329 = vpop.xlane.xlu0 %328
          %v330 = vsel %vm326, %v322, -inf
          %331 = vmax.xlane.f32.xlu0 %v330
          %v332 = vpop.xlane.xlu0 %331
          %vm333 = vcmp.eq.f32.partialorder %v319, %v329
          %vm334 = vcmp.eq.f32.partialorder %v322, %v332
          %v335 = vsel %vm333, %v325, 4
          %v336 = vsel %vm334, %v325, 4
          %v337 = vsel %vm326, %v335, 2147483647
          %v338 = vand.u32 %v337, 65535
          %v339 = vshra.s32 %v337, 16
          %v340 = vcvt.s32.f32 %v338
          %v341 = vcvt.s32.f32 %v339
          %342 = vmin.xlane.f32.xlu0 %v341
          %v343 = vpop.xlane.xlu0 %342
          %vm344 = vcmp.eq.f32.partialorder %v341, %v343
          %v345 = vsel %vm344, %v340, inf
          %346 = vmin.xlane.f32.xlu0 %v345
          %v347 = vpop.xlane.xlu0 %346
          %v348 = vcvt.f32.s32 %v347
          %v349 = vcvt.f32.s32 %v343
          %v350 = vshll.u32 %v349, 16
          %v351 = vadd.s32 %v350, %v348
          %v352 = vsel %vm326, %v336, 2147483647
          %v353 = vand.u32 %v352, 65535
          %v354 = vshra.s32 %v352, 16
          %v355 = vcvt.s32.f32 %v353
          %v356 = vcvt.s32.f32 %v354
          %357 = vmin.xlane.f32.xlu0 %v356
          %v358 = vpop.xlane.xlu0 %357
          %vm359 = vcmp.eq.f32.partialorder %v356, %v358
          %v360 = vsel %vm359, %v355, inf
          %361 = vmin.xlane.f32.xlu0 %v360
          %v362 = vpop.xlane.xlu0 %361
          %v363 = vcvt.f32.s32 %v362
          %v364 = vcvt.f32.s32 %v358
          %v365 = vshll.u32 %v364, 16
          %v366 = vadd.s32 %v365, %v363
          %vm367 = vcmp.eq.s32.totalorder %v325, %v351
          %vm368 = vcmp.eq.s32.totalorder %v325, %v366
          %v369 = vsel %vm367, -1e+30, %v319
          %v370 = vsel %vm368, -1e+30, %v322
          %v371 = vsel %vm326, %v369, -inf
          %372 = vmax.xlane.f32.xlu0 %v371
          %v373 = vpop.xlane.xlu0 %372
          %v374 = vsel %vm326, %v370, -inf
          %375 = vmax.xlane.f32.xlu0 %v374
          %v376 = vpop.xlane.xlu0 %375
          %vm377 = vcmp.eq.f32.partialorder %v369, %v373
          %vm378 = vcmp.eq.f32.partialorder %v370, %v376
          %v379 = vsel %vm377, %v325, 4
          %v380 = vsel %vm378, %v325, 4
          %v381 = vsel %vm326, %v379, 2147483647
          %v382 = vand.u32 %v381, 65535
          %v383 = vshra.s32 %v381, 16
          %v384 = vcvt.s32.f32 %v382
          %v385 = vcvt.s32.f32 %v383
          %386 = vmin.xlane.f32.xlu0 %v385
          %v387 = vpop.xlane.xlu0 %386
          %vm388 = vcmp.eq.f32.partialorder %v385, %v387
          %v389 = vsel %vm388, %v384, inf
          %390 = vmin.xlane.f32.xlu0 %v389
          %v391 = vpop.xlane.xlu0 %390
          %v392 = vcvt.f32.s32 %v391
          %v393 = vcvt.f32.s32 %v387
          %v394 = vshll.u32 %v393, 16
          %v395 = vadd.s32 %v394, %v392
          %v396 = vsel %vm326, %v380, 2147483647
          %v397 = vand.u32 %v396, 65535
          %v398 = vshra.s32 %v396, 16
          %v399 = vcvt.s32.f32 %v397
          %v400 = vcvt.s32.f32 %v398
          %401 = vmin.xlane.f32.xlu0 %v400
          %v402 = vpop.xlane.xlu0 %401
          %vm403 = vcmp.eq.f32.partialorder %v400, %v402
          %v404 = vsel %vm403, %v399, inf
          %405 = vmin.xlane.f32.xlu0 %v404
          %v406 = vpop.xlane.xlu0 %405
          %v407 = vcvt.f32.s32 %v406
          %v408 = vcvt.f32.s32 %v402
          %v409 = vshll.u32 %v408, 16
          %v410 = vadd.s32 %v409, %v407
          %vm411 = vcmp.eq.s32.totalorder %v325, %v395
          %vm412 = vcmp.eq.s32.totalorder %v325, %v410
          %vm413 = vcmask 7168
          %v414 = vsel %vm413, %v329, %v373
          %v415 = vsel %vm413, %v332, %v376
          %vm416 = vcmask 15360
          %v417 = vsel %vm416, %v414, -inf
          %418 = vmax.xlane.f32.xlu0 %v417
          %v419 = vpop.xlane.xlu0 %418
          %v420 = vsel %vm416, %v415, -inf
          %421 = vmax.xlane.f32.xlu0 %v420
          %v422 = vpop.xlane.xlu0 %421
          %v423 = vsub.f32 %v414, %v419
          %v424 = vsub.f32 %v415, %v422
          %v425 = vmul.f32 %v423, 1.442695
          %v426 = vpow.pop %v425
          %v427 = vmul.f32 %v424, 1.442695
          %v428 = vpow.pop %v427
          %v429 = vsel %vm416, %v426, 0.0
          %430 = vadd.xlane.f32.xlu0 %v429
          %v431 = vpop.xlane.xlu0 %430
          %v432 = vsel %vm416, %v428, 0.0
          %433 = vadd.xlane.f32.xlu0 %v432
          %v434 = vpop.xlane.xlu0 %433
          %v435 = vrcp.pop %v431
          %v436 = vmul.f32 %v431, %v435
          %v437 = vsub.f32 1.0, %v436
          %v438 = vmul.f32 %v435, %v437
          %v439 = vadd.f32 %v435, %v438
          %vm440 = vweird.f32 %v431
          %vm441 = vweird.f32 %v435
          %vm442 = vmor %vm440, %vm441
          %v443 = vsel %vm442, %v435, %v439
          %v444 = vand.u32 2147483647, %v431
          %vm445 = vcmp.eq.f32.partialorder %v444, 8.507059e+37
          %v446 = vand.u32 %v431, 2147483648
          %v447 = vor.u32 1.1754944e-38, %v446
          %v448 = vsel %vm445, %v447, %v443
          %v449 = vmul.f32 %v426, %v448
          %v450 = vrcp.pop %v434
          %v451 = vmul.f32 %v434, %v450
          %v452 = vsub.f32 1.0, %v451
          %v453 = vmul.f32 %v450, %v452
          %v454 = vadd.f32 %v450, %v453
          %vm455 = vweird.f32 %v434
          %vm456 = vweird.f32 %v450
          %vm457 = vmor %vm455, %vm456
          %v458 = vsel %vm457, %v450, %v454
          %v459 = vand.u32 2147483647, %v434
          %vm460 = vcmp.eq.f32.partialorder %v459, 8.507059e+37
          %v461 = vand.u32 %v434, 2147483648
          %v462 = vor.u32 1.1754944e-38, %v461
          %v463 = vsel %vm460, %v462, %v458
          %v464 = vmul.f32 %v428, %v463
          %466 = vset.pattern.permute.xlu0 0
          %467 = vperm.xlu0 %466, %v449
          %v468 = vpop.permute.xlu0 %467
          %471 = vset.pattern.permute.xlu0 0
          %472 = vperm.xlu0 %471, %v464
          %v473 = vpop.permute.xlu0 %472
          %v475 = vsel %vm367, %v468, 0.0
          %v476 = vsel %vm368, %v473, 0.0
          %v477 = vadd.f32 %v475, 0.0
          %v478 = vadd.f32 %v476, 0.0
          %479 = vset.pattern.permute.xlu0 1
          %480 = vperm.xlu0 %479, %v449
          %v481 = vpop.permute.xlu0 %480
          %483 = vset.pattern.permute.xlu0 1
          %484 = vperm.xlu0 %483, %v464
          %v485 = vpop.permute.xlu0 %484
          %v487 = vsel %vm411, %v481, 0.0
          %v488 = vsel %vm412, %v485, 0.0
          %v489 = vadd.f32 %v477, %v487
          %v490 = vadd.f32 %v478, %v488
          %491 = vst.msk [vmem:[#allocation2] sm:$0xff] %vm326, %v489
          %492 = vst.msk [vmem:[#allocation2 + $0x8] sm:$0xff] %vm326, %v490
        $region44: #{tpu_custom_call.1} parent=35 // pred_fallthru
          _
        // Predicated region
        $region45: #{tpu_custom_call.1} parent=35 // pred_check
          %p493 = pneg %p281
        $region46: #{tpu_custom_call.1} parent=35 // pred_check_branch
          %495 = sbr.rel (%p493) target = $region48
        $region47: #{tpu_custom_call.1} parent=35 // pred_region
          %vm496 = vcmask 261120
          %497 = vst.msk [vmem:[#allocation3] sm:$0xff] %vm496, 0.0
          %498 = vst.msk [vmem:[#allocation3 + $0x8] sm:$0xff] %vm496, 0.0
        $region48: #{tpu_custom_call.1} parent=35 // pred_fallthru
          _
        %v499 = vld [vmem:[%s271] sm:$0xff]
        %v500 = vld [vmem:[%s271 + $0x8] sm:$0xff]
        %v501 = vld [vmem:[%s236] sm:$0xff]
        %v502 = vld [vmem:[%s236 + $0x8] sm:$0xff]
        %v503 = vld [vmem:[%s236 + $0x10] sm:$0xff]
        %v504 = vld [vmem:[%s236 + $0x18] sm:$0xff]
        %vm505 = vcmask 261120
        %v507 = vsel %vm505, %v499, 0
        %v510 = vsel %vm505, %v500, 0
        %512 = vmatpush.msra.mxu0 0.0
        %513 = vmatpush.msra.mxu0 0.0
        %514 = vmatpush.msra.mxu0 0.0
        %515 = vmatpush.msra.mxu0 0.0
        %516 = vmatpush.msra.mxu0 0.0
        %517 = vmatpush.msra.mxu0 0.0
        %518 = vmatpush.msra.mxu0 0.0
        %519 = vmatpush.msra.mxu0 0.0
        %520 = vmatpush.msra.mxu0 0.0
        %521 = vmatpush.msra.mxu0 0.0
        %522 = vmatpush.msra.mxu0 0.0
        %523 = vmatpush.msra.mxu0 0.0
        %524 = vmatpush.msra.mxu0 %v504
        %525 = vmatpush.msra.mxu0 %v503
        %526 = vmatpush.msra.mxu0 %v502
        %527 = vmatpush.msra.mxu0 %v501
        %528 = vmatmul.f32.gmra.mxu0 %v507
        %v529 = vpop.f32.mrf.mxu0
        %v530 = vadd.f32 0.0, %v529
        %531 = vmatmul.f32.gmra.mxu0 %v510
        %v532 = vpop.f32.mrf.mxu0
        %v533 = vadd.f32 0.0, %v532
        %534 = vdwg.mxu0
        %v535 = vld [vmem:[#allocation2] sm:$0xff]
        %v536 = vld [vmem:[#allocation2 + $0x8] sm:$0xff]
        %v537 = vlaneseq
        %v538 = vand.u32 %v537, 127
        %v539 = vstv %s26
        %vm540 = vcmp.eq.s32.totalorder %v538, %v539
        %v541 = vsel %vm540, %v535, 0.0
        %v542 = vsel %vm540, %v536, 0.0
        %vm543 = vcmask 31744
        %v544 = vsel %vm543, %v541, 0.0
        %545 = vadd.xlane.f32.xlu0 %v544
        %v546 = vpop.xlane.xlu0 %545
        %v547 = vsel %vm543, %v542, 0.0
        %548 = vadd.xlane.f32.xlu0 %v547
        %v549 = vpop.xlane.xlu0 %548
        %v550 = vld [vmem:[#allocation3] sm:$0xff]
        %v551 = vld [vmem:[#allocation3 + $0x8] sm:$0xff]
        %v552 = vmul.f32 %v546, %v530
        %v553 = vmul.f32 %v549, %v533
        %v554 = vadd.f32 %v550, %v552
        %v555 = vadd.f32 %v551, %v553
        %556 = vst.msk [vmem:[#allocation3] sm:$0xff] %vm505, %v554
        %557 = vst.msk [vmem:[#allocation3 + $0x8] sm:$0xff] %vm505, %v555
        %p558 = scmp.eq.s32.totalorder %s26, 3
        // Predicated region
        $region49: #{tpu_custom_call.1} parent=35 // pred_check
          %p559 = pneg %p558
        $region50: #{tpu_custom_call.1} parent=35 // pred_check_branch
          %561 = sbr.rel (%p559) target = $region52
        $region51: #{tpu_custom_call.1} parent=35 // pred_region
          %v562 = vld [vmem:[#allocation3] sm:$0xff]
          %v563 = vld [vmem:[#allocation3 + $0x8] sm:$0xff]
          %564 = vst.msk [vmem:[#allocation7] sm:$0xff] %vm505, %v562
          %565 = vst.msk [vmem:[#allocation7 + $0x8] sm:$0xff] %vm505, %v563
        $region52: #{tpu_custom_call.1} parent=35 // pred_fallthru
          _
        // Predicated region
        $region53: #{tpu_custom_call.1} parent=35 // pred_check
          %p566 = pneg %p159
        $region54: #{tpu_custom_call.1} parent=35 // pred_check_branch
          %568 = sbr.rel (%p566) target = $region56
        $region55: #{tpu_custom_call.1} parent=35 // pred_region
          %s569 = smul.u32 2, %s24
          %571 = vsyncadd [#allocation6], 0
          %s572 = sadd.s32 %s25, %s569
          %s573 = smul.addr %s572, 8
          %s574 = scalar_lea.hbm %s4, %s573
          %s575 = sshll.u32 [#allocation7], 4
          %s576 = int_to_ptr.vmem [resolvable:$true] %s575
          %s577 = sshll.u32 %s574, 4
          %s578 = int_to_ptr.hbm [resolvable:$true] %s577
          %583 = dma.vmem_to_hbm [thread:$0]  %s576, 256, %s578, [#allocation6], 128, 128, 8
        $region56: #{tpu_custom_call.1} parent=35 // pred_fallthru
          _
        // Predicated region
        $region57: #{tpu_custom_call.1} parent=35 // pred_check
          %p584 = pneg %p159
        $region58: #{tpu_custom_call.1} parent=35 // pred_check_branch
          %586 = sbr.rel (%p584) target = $region60
        $region59: #{tpu_custom_call.1} parent=35 // pred_region
          %588 = dma.done [#allocation6], 256
        $region60: #{tpu_custom_call.1} parent=35 // pred_fallthru
          _
      $region36: #{tpu_custom_call.1} parent=5 // pred_fallthru
        _
      %p589 = scmp.le.s32.totalorder 2, %s14
      // Predicated region
      $region61: #{tpu_custom_call.1} parent=5 // pred_check
        %p590 = pneg %p589
      $region62: #{tpu_custom_call.1} parent=5 // pred_check_branch
        %592 = sbr.rel (%p590) target = $region64
      $region63: #{tpu_custom_call.1} parent=5 // pred_region
        %s593 = ssub.s32 %s14, 2
      $region64: #{tpu_custom_call.1} parent=5 // pred_fallthru
        _
    $region6: #{tpu_custom_call.1} parent=1 // loop_footer
      %s18 = sadd.s32 1, %s14
    $region7: #{tpu_custom_call.1} parent=1 // loop_footer_branch
      %13 = sbr.rel target = $region3
    $region8: #{tpu_custom_call.1} parent=1 // loop_exit
      _
    %594 = vsyncpa [#allocation5], 1
    %s595 = scalar_lea.sflag [#allocation5], 1
    %596 = vsyncpa %s595, 1
    %597 = vsyncpa [#allocation6], 1
    %s598 = scalar_lea.sflag [#allocation6], 1
    %599 = vsyncpa %s598, 1

</llo_original>
